<compile_context>
chip_gen: v6e
topology: v6e:2x2x1
jax: 0.10.0
libtpu: 0.0.40
codegen_flags: <defaults>
</compile_context>

<pallas_src>
import functools
import math

import jax
import jax.numpy as jnp
from jax import lax
from jax.experimental import pallas as pl
from jax.experimental.pallas import tpu as pltpu


def _pick_tile(dim, prefs):
    """Largest preferred tile that evenly divides `dim`, else the full dim."""
    for p in prefs:
        if dim >= p and dim % p == 0:
            return p
    return dim


# ----------------------------------------------------------------------------
# Kernel 1: Conv1D with rf == 1  ==  addmm(b, x.view(-1, nx), w)
# Tiled (M//tm, N//tn, K//tk) matmul with f32 VMEM accumulator.
# ----------------------------------------------------------------------------
def _linear_kernel(x_ref, w_ref, b_ref, o_ref, acc_ref):
    k = pl.program_id(2)

    @pl.when(k == 0)
    def _init():
        acc_ref[...] = jnp.zeros(acc_ref.shape, acc_ref.dtype)

    acc_ref[...] += jnp.dot(x_ref[...], w_ref[...],
                            preferred_element_type=jnp.float32)

    @pl.when(k == pl.num_programs(2) - 1)
    def _finalize():
        o_ref[...] = (acc_ref[...] + b_ref[...]).astype(o_ref.dtype)


def conv1d_rf1(x2d, w, b):
    """x2d: (M, K), w: (K, N), b: (N,) -> (M, N)."""
    M, K = x2d.shape
    _, N = w.shape
    tm = _pick_tile(M, (256, 128))
    tn = _pick_tile(N, (256, 128))
    tk = _pick_tile(K, (512, 256, 128))
    grid = (M // tm, N // tn, K // tk)
    itemsize = x2d.dtype.itemsize
    return pl.pallas_call(
        _linear_kernel,
        out_shape=jax.ShapeDtypeStruct((M, N), x2d.dtype),
        grid=grid,
        in_specs=[
            pl.BlockSpec((tm, tk), lambda i, j, k: (i, k)),
            pl.BlockSpec((tk, tn), lambda i, j, k: (k, j)),
            pl.BlockSpec((1, tn), lambda i, j, k: (0, j)),
        ],
        out_specs=pl.BlockSpec((tm, tn), lambda i, j, k: (i, j)),
        scratch_shapes=[pltpu.VMEM((tm, tn), jnp.float32)],
        compiler_params=pltpu.CompilerParams(
            dimension_semantics=("parallel", "parallel", "arbitrary")),
        cost_estimate=pl.CostEstimate(
            flops=2 * M * K * N,
            transcendentals=0,
            bytes_accessed=int((M * K + K * N + M * N + N) * itemsize)),
    )(x2d, w, b.reshape(1, N))


# ----------------------------------------------------------------------------
# Kernel 2: flash-style masked attention core with online softmax + causal skip.
# Inputs are the fused qkv activation in (B, T, 3, H, hd) layout (passed 3x with
# different BlockSpecs selecting the q / k / v chunk) plus a (B, 1, T) sequence
# mask. Output is written directly in (B, T, H, hd) layout.
# ----------------------------------------------------------------------------
def _flash_attn_kernel(seqmask_ref, q_ref, k_ref, v_ref, o_ref,
                       m_sc, l_sc, acc_sc, *, scale, compute_dtype, tq, tk):
    _, _, n_head, head_dim = q_ref.shape
    qi = pl.program_id(1)
    ki = pl.program_id(2)
    nk = pl.num_programs(2)

    @pl.when(ki == 0)
    def _init():
        m_sc[...] = jnp.full(m_sc.shape, -jnp.inf, dtype=m_sc.dtype)
        l_sc[...] = jnp.zeros(l_sc.shape, l_sc.dtype)
        acc_sc[...] = jnp.zeros(acc_sc.shape, acc_sc.dtype)

    # kv tiles strictly above the causal diagonal contribute nothing -> skip.
    block_needed = ki * tk < (qi + 1) * tq

    @pl.when(block_needed)
    def _compute():
        # Causal + sequence mask for this (q-tile, kv-tile), shared across heads.
        q_pos = qi * tq + lax.broadcasted_iota(jnp.int32, (tq, tk), 0)
        k_pos = ki * tk + lax.broadcasted_iota(jnp.int32, (tq, tk), 1)
        kv_valid = seqmask_ref[0] > 0.0                    # (1, tk)
        mask = (k_pos <= q_pos) & kv_valid                 # (tq, tk)

        mm_dtype = compute_dtype if compute_dtype is not None else v_ref.dtype
        sm_scale = 1.0 / math.sqrt(head_dim)

        for h in range(n_head):                            # static unroll over heads
            q_h = q_ref[0, :, h, :]                        # (tq, hd)
            if scale:
                q_h = q_h * sm_scale                       # cheaper than scaling (tq, tk)
            q_h = q_h.astype(mm_dtype)
            k_h = k_ref[0, :, h, :].astype(mm_dtype)       # (tk, hd)
            v_h = v_ref[0, :, h, :].astype(mm_dtype)       # (tk, hd)

            # scores = q_h @ k_h^T  (contract head_dim; no pre-transposed K needed)
            s = lax.dot_general(q_h, k_h, (((1,), (1,)), ((), ())),
                                preferred_element_type=jnp.float32)   # (tq, tk)
            s = jnp.where(mask, s, -1e9)

            m_prev = m_sc[h]                                           # (tq, 1)
            m_new = jnp.maximum(m_prev, jnp.max(s, axis=-1, keepdims=True))
            alpha = jnp.exp(m_prev - m_new)
            p = jnp.exp(s - m_new)                                     # (tq, tk)
            l_sc[h] = alpha * l_sc[h] + jnp.sum(p, axis=-1, keepdims=True)
            pv = lax.dot_general(p.astype(mm_dtype), v_h,
                                 (((1,), (0,)), ((), ())),
                                 preferred_element_type=jnp.float32)   # (tq, hd)
            acc_sc[h] = alpha * acc_sc[h] + pv
            m_sc[h] = m_new

    @pl.when(ki == nk - 1)
    def _finalize():
        for h in range(n_head):
            inv_l = pl.reciprocal(l_sc[h], approx=True)                # (tq, 1)
            o_ref[0, :, h, :] = (acc_sc[h] * inv_l).astype(o_ref.dtype)


def attention_core(qkv5, sequence_mask, *, n_head, head_dim, scale,
                   compute_dtype=None, tq=None, tk=None):
    """qkv5: (B, T, 3, H, hd); sequence_mask: (B, T) -> (B, T, H, hd)."""
    B, T = qkv5.shape[0], qkv5.shape[1]
    if tq is None:
        tq = _pick_tile(T, (256, 128))
    if tk is None:
        tk = _pick_tile(T, (256, 128))
    nq, nk = T // tq, T // tk
    seqmask3 = sequence_mask.reshape(B, 1, T).astype(jnp.float32)

    def kv_block(qi, ki):
        # Clamp skipped (fully above-diagonal) kv tiles to the last needed tile so
        # the pipeline sees an unchanged block index and skips the HBM DMA.
        limit = ((qi + 1) * tq - 1) // tk
        return jnp.minimum(ki, limit)

    kernel = functools.partial(_flash_attn_kernel, scale=scale,
                               compute_dtype=compute_dtype, tq=tq, tk=tk)

    # Advisory cost estimate (causal skip ~halves the processed kv tiles).
    kv_blocks = sum(min(((qi + 1) * tq - 1) // tk + 1, nk) for qi in range(nq))
    nx = n_head * head_dim
    itemsize = qkv5.dtype.itemsize
    flops = 4 * B * n_head * kv_blocks * tq * tk * head_dim
    bytes_acc = itemsize * (B * T * nx                      # q tiles (read once each)
                            + 2 * B * kv_blocks * tk * nx   # k/v tiles actually fetched
                            + B * T * nx)                   # output
    bytes_acc += 4 * B * T * nq                             # sequence-mask slabs

    return pl.pallas_call(
        kernel,
        out_shape=jax.ShapeDtypeStruct((B, T, n_head, head_dim), qkv5.dtype),
        grid=(B, nq, nk),
        in_specs=[
            pl.BlockSpec((1, 1, tk), lambda b, qi, ki: (b, 0, kv_block(qi, ki))),
            pl.BlockSpec((1, tq, None, n_head, head_dim),
                         lambda b, qi, ki: (b, qi, 0, 0, 0)),                # q chunk
            pl.BlockSpec((1, tk, None, n_head, head_dim),
                         lambda b, qi, ki: (b, kv_block(qi, ki), 1, 0, 0)),  # k chunk
            pl.BlockSpec((1, tk, None, n_head, head_dim),
                         lambda b, qi, ki: (b, kv_block(qi, ki), 2, 0, 0)),  # v chunk
        ],
        out_specs=pl.BlockSpec((1, tq, n_head, head_dim),
                               lambda b, qi, ki: (b, qi, 0, 0)),
        scratch_shapes=[
            pltpu.VMEM((n_head, tq, 1), jnp.float32),          # running max m
            pltpu.VMEM((n_head, tq, 1), jnp.float32),          # running sum l
            pltpu.VMEM((n_head, tq, head_dim), jnp.float32),   # accumulator
        ],
        compiler_params=pltpu.CompilerParams(
            dimension_semantics=("parallel", "parallel", "arbitrary")),
        cost_estimate=pl.CostEstimate(
            flops=int(flops),
            transcendentals=int(B * n_head * kv_blocks * tq * tk),
            bytes_accessed=int(bytes_acc)),
    )(seqmask3, qkv5, qkv5, qkv5)


# ----------------------------------------------------------------------------
# Full module forward (glue in plain JAX, hot paths in Pallas)
# ----------------------------------------------------------------------------
def attention_forward(x, sequence_mask, params, *, n_head, scale=False,
                      compute_dtype=None, attn_tq=None, attn_tk=None):
    """x: (B, T, nx); sequence_mask: (B, T) of {0,1} or None."""
    B, T, nx = x.shape
    hd = nx // n_head
    if sequence_mask is None:
        sequence_mask = jnp.ones((B, T), dtype=jnp.float32)

    # c_attn (Conv1D rf=1): (B*T, nx) @ (nx, 3*nx) + b
    qkv = conv1d_rf1(x.reshape(B * T, nx), params["c_attn_w"], params["c_attn_b"])
    # Columns of qkv are [query | key | value], each (H, hd).
    qkv5 = qkv.reshape(B, T, 3, n_head, hd)

    # Flash attention core; output already in (B, T, H, hd) layout.
    a = attention_core(qkv5, sequence_mask, n_head=n_head, head_dim=hd,
                       scale=scale, compute_dtype=compute_dtype,
                       tq=attn_tq, tk=attn_tk)

    # merge_heads == free reshape in this layout.
    a2d = a.reshape(B * T, nx)

    # c_proj (Conv1D rf=1)
    out = conv1d_rf1(a2d, params["c_proj_w"], params["c_proj_b"]).reshape(B, T, nx)
    # attn_dropout / resid_dropout: identity (eval)
    return out


# ----------------------------------------------------------------------------
# Pure-JAX reference (for correctness check)
# ----------------------------------------------------------------------------
def attention_reference(x, sequence_mask, params, *, n_head, scale=False):
    B, T, nx = x.shape
    hd = nx // n_head
    qkv = x.reshape(B * T, nx) @ params["c_attn_w"] + params["c_attn_b"]
    qkv = qkv.reshape(B, T, 3 * nx)
    query, key, value = qkv[..., :nx], qkv[..., nx:2 * nx], qkv[..., 2 * nx:]
    q = query.reshape(B, T, n_head, hd).transpose(0, 2, 1, 3)
    k = key.reshape(B, T, n_head, hd).transpose(0, 2, 3, 1)
    v = value.reshape(B, T, n_head, hd).transpose(0, 2, 1, 3)
    w = jnp.einsum("bhqd,bhdk->bhqk", q, k)
    if scale:
        w = w / math.sqrt(hd)
    tril = jnp.tril(jnp.ones((T, T), dtype=x.dtype))
    m = tril[None, None, :, :] * sequence_mask[:, None, None, :]
    w = w * m + (-1e9) * (1.0 - m)
    w = jax.nn.softmax(w, axis=-1)
    a = jnp.einsum("bhqk,bhkd->bhqd", w, v)
    a = a.transpose(0, 2, 1, 3).reshape(B, T, nx)
    return (a.reshape(B * T, nx) @ params["c_proj_w"] + params["c_proj_b"]).reshape(B, T, nx)


if __name__ == "__main__":
    def run_case(B, T, nx, nH, scale, tq=None, tk=None):
        key = jax.random.PRNGKey(0)
        kx, kw1, kw2 = jax.random.split(key, 3)
        x = jax.random.normal(kx, (B, T, nx), dtype=jnp.float32)
        # sequence mask: mask out last 2 key positions of batch 1
        sequence_mask = jnp.ones((B, T), dtype=jnp.float32)
        sequence_mask = sequence_mask.at[1, T - 2:].set(0.0)
        params = {
            "c_attn_w": 0.02 * jax.random.normal(kw1, (nx, 3 * nx), dtype=jnp.float32),
            "c_attn_b": jnp.zeros((3 * nx,), dtype=jnp.float32),
            "c_proj_w": 0.02 * jax.random.normal(kw2, (nx, nx), dtype=jnp.float32),
            "c_proj_b": jnp.zeros((nx,), dtype=jnp.float32),
        }
        out = attention_forward(x, sequence_mask, params, n_head=nH, scale=scale,
                                attn_tq=tq, attn_tk=tk)
        out = jax.block_until_ready(out)
        ref = attention_reference(x, sequence_mask, params, n_head=nH, scale=scale)
        assert out.shape == (B, T, nx)
        # tolerance accommodates the EUP approximate reciprocal in the softmax
        assert jnp.allclose(out, ref, atol=2e-2, rtol=2e-2), (
            f"mismatch vs reference for B={B}, T={T}, nx={nx}, nH={nH}")

    # Small config matching the module's intent: B=2, seq(T)=8, nx=32, heads=4.
    run_case(B=2, T=8, nx=32, nH=4, scale=True)
    # Multi-tile config exercising the causal block-skip / clamped kv DMA path.
    run_case(B=2, T=256, nx=64, nH=4, scale=True, tq=128, tk=128)

    print("KERNEL_OK")
</pallas_src>

<mosaic_0001>
module attributes {stable_mosaic.version = 11 : i64} {
  func.func @_linear_kernel(%arg0: i32, %arg1: i32, %arg2: i32, %arg3: memref<16x32xf32, #tpu.memory_space<vmem>>, %arg4: memref<32x96xf32, #tpu.memory_space<vmem>>, %arg5: memref<1x96xf32, #tpu.memory_space<vmem>>, %arg6: memref<16x96xf32, #tpu.memory_space<vmem>>, %arg7: memref<16x96xf32, #tpu.memory_space<vmem>>) attributes {dimension_semantics = [#tpu.dimension_semantics<parallel>, #tpu.dimension_semantics<parallel>, #tpu.dimension_semantics<arbitrary>], iteration_bounds = array<i64: 1, 1, 1>, scalar_prefetch = 0 : i64, scratch_operands = 1 : i64, tpu.core_type = #tpu.core_type<tc>, window_params = [{transform_indices = @transform_0, window_bounds = array<i64: 16, 32>}, {transform_indices = @transform_1, window_bounds = array<i64: 32, 96>}, {transform_indices = @transform_2, window_bounds = array<i64: 1, 96>}, {transform_indices = @transform_3, window_bounds = array<i64: 16, 96>}]} {
    %c0_i32 = arith.constant 0 : i32
    %0 = arith.cmpi eq, %arg2, %c0_i32 : i32
    %1 = arith.extui %0 : i1 to i32
    %c0_i32_0 = arith.constant 0 : i32
    %2 = arith.cmpi ne, %1, %c0_i32_0 : i32
    scf.if %2 {
      %cst_10 = arith.constant 0.000000e+00 : f32
      %12 = vector.broadcast %cst_10 : f32 to vector<16x96xf32>
      %c0_11 = arith.constant 0 : index
      %c0_12 = arith.constant 0 : index
      %13 = vector.load %arg7[%c0_11, %c0_12] : memref<16x96xf32, #tpu.memory_space<vmem>>, vector<16x96xf32>
      tpu.vector_store %arg7[%c0_11, %c0_12], %12 {strides = array<i32>} : memref<16x96xf32, #tpu.memory_space<vmem>>, vector<16x96xf32>,
    } else {
    }
    %c0 = arith.constant 0 : index
    %c0_1 = arith.constant 0 : index
    %3 = vector.load %arg7[%c0, %c0_1] : memref<16x96xf32, #tpu.memory_space<vmem>>, vector<16x96xf32>
    %c0_2 = arith.constant 0 : index
    %c0_3 = arith.constant 0 : index
    %4 = vector.load %arg3[%c0_2, %c0_3] : memref<16x32xf32, #tpu.memory_space<vmem>>, vector<16x32xf32>
    %c0_4 = arith.constant 0 : index
    %c0_5 = arith.constant 0 : index
    %5 = vector.load %arg4[%c0_4, %c0_5] : memref<32x96xf32, #tpu.memory_space<vmem>>, vector<32x96xf32>
    %cst = arith.constant dense<0.000000e+00> : vector<16x96xf32>
    %6 = tpu.matmul %4, %5, %cst {dimension_numbers = #tpu.dot_dimension_numbers<[1], [0], [0], [1], [0, 0, 1, 1], [], []>} : vector<16x32xf32>, vector<32x96xf32>, vector<16x96xf32> -> vector<16x96xf32>
    %7 = arith.addf %3, %6 : vector<16x96xf32>
    %c0_6 = arith.constant 0 : index
    %c0_7 = arith.constant 0 : index
    %8 = vector.load %arg7[%c0_6, %c0_7] : memref<16x96xf32, #tpu.memory_space<vmem>>, vector<16x96xf32>
    tpu.vector_store %arg7[%c0_6, %c0_7], %7 {strides = array<i32>} : memref<16x96xf32, #tpu.memory_space<vmem>>, vector<16x96xf32>,
    %c0_i32_8 = arith.constant 0 : i32
    %9 = arith.cmpi eq, %arg2, %c0_i32_8 : i32
    %10 = arith.extui %9 : i1 to i32
    %c0_i32_9 = arith.constant 0 : i32
    %11 = arith.cmpi ne, %10, %c0_i32_9 : i32
    scf.if %11 {
      %c0_10 = arith.constant 0 : index
      %c0_11 = arith.constant 0 : index
      %12 = vector.load %arg7[%c0_10, %c0_11] : memref<16x96xf32, #tpu.memory_space<vmem>>, vector<16x96xf32>
      %c0_12 = arith.constant 0 : index
      %c0_13 = arith.constant 0 : index
      %13 = vector.load %arg5[%c0_12, %c0_13] : memref<1x96xf32, #tpu.memory_space<vmem>>, vector<1x96xf32>
      %14 = vector.broadcast %13 : vector<1x96xf32> to vector<16x96xf32>
      %15 = arith.addf %12, %14 : vector<16x96xf32>
      %c0_14 = arith.constant 0 : index
      %c0_15 = arith.constant 0 : index
      %16 = vector.load %arg6[%c0_14, %c0_15] : memref<16x96xf32, #tpu.memory_space<vmem>>, vector<16x96xf32>
      tpu.vector_store %arg6[%c0_14, %c0_15], %15 {strides = array<i32>} : memref<16x96xf32, #tpu.memory_space<vmem>>, vector<16x96xf32>,
    } else {
    }
    return
  }
  func.func @transform_0(%arg0: i32, %arg1: i32, %arg2: i32) -> (i32, i32) {
    %c0_i32 = arith.constant 0 : i32
    return %arg0, %arg2 : i32, i32
  }
  func.func @transform_1(%arg0: i32, %arg1: i32, %arg2: i32) -> (i32, i32) {
    %c0_i32 = arith.constant 0 : i32
    return %arg2, %arg1 : i32, i32
  }
  func.func @transform_2(%arg0: i32, %arg1: i32, %arg2: i32) -> (i32, i32) {
    %c0_i32 = arith.constant 0 : i32
    %c0_i32_0 = arith.constant 0 : i32
    return %c0_i32, %arg1 : i32, i32
  }
  func.func @transform_3(%arg0: i32, %arg1: i32, %arg2: i32) -> (i32, i32) {
    %c0_i32 = arith.constant 0 : i32
    return %arg0, %arg1 : i32, i32
  }
}

</mosaic_0001>

<llo_original>
// kernel: tpu_custom_call.1
$region0: #{tpu_custom_call.1}
  #allocation0 [shape = 'u32[]', space=smem, size = 0x4, offset = 0x4, fixed_abs, tag = 'smem constant byte address 0x4 - core index']
  #allocation1 [shape = 'u32[144,128]{1,0:T(1,128)}', space=vmem, size = 0x12000, scoped, tag = 'internal scratch']
  #allocation2 [shape = 'f32[16,96]{1,0:T(8,128)}', space=vmem, size = 0x2000, scoped, tag = 'scratch operand']
  %s0 = inlined_call_operand.hbm [shape: f32[16,32], index: 0, kind: input, shape index: {}]
  %s1 = inlined_call_operand.hbm [shape: f32[32,96], index: 1, kind: input, shape index: {}]
  %s2 = inlined_call_operand.vmem [shape: f32[1,96], index: 2, kind: input, shape index: {}]
  %s3 = inlined_call_operand.hbm [shape: f32[16,96], index: 3, kind: output, shape index: {}]
  %s4 = sld [smem:[#allocation0]]
  $region38: #{tpu_custom_call.1} parent=0
    _
  %s6 = ssub.s32 1, %s4
  %s7 = scalar_select 0, %s6, %s4
  $region1: #{tpu_custom_call.1} parent=0
    #allocation3 [shape = 'u8[8192]{0}', space=vmem, size = 0x2000, scoped, tag = 'input window, operand 0, single buffered']
    #allocation4 [shape = 's32[1]{0}', space=sflag, size = 0x4, scoped, tag = 'scoped memory for tpu_custom_call.1']
    #allocation5 [shape = 's32[1]{0}', space=sflag, size = 0x4, scoped, tag = 'scoped memory for tpu_custom_call.1']
    #allocation6 [shape = 'u8[16384]{0}', space=vmem, size = 0x4000, scoped, tag = 'input window, operand 1, single buffered']
    #allocation7 [shape = 's32[1]{0}', space=sflag, size = 0x4, scoped, tag = 'scoped memory for tpu_custom_call.1']
    #allocation8 [shape = 'u8[8192]{0}', space=vmem, size = 0x2000, scoped, tag = 'output window, operand 0, single buffered']
    %8 = vsyncpa [#allocation4], 0
    %9 = vsyncpa [#allocation7], 0
    %10 = vsyncpa [#allocation5], 0
    // Predicated region
    $region2: #{tpu_custom_call.1} parent=1 // pred_check
      _
    $region3: #{tpu_custom_call.1} parent=1 // pred_check_branch
      %12 = sbr.rel (0) target = $region5
    $region4: #{tpu_custom_call.1} parent=1 // pred_region
      %s14 = ssub.s32 256, 256
      %15 = vsyncadd [#allocation4], %s14
      %s16 = sshll.u32 [#allocation3], 4
      %s17 = int_to_ptr.vmem [resolvable:$true] %s16
      %22 = dma.hbm_to_vmem [thread:$0]  %s0, 256, %s17, [#allocation4], 128, 128, 8
    $region5: #{tpu_custom_call.1} parent=1 // pred_fallthru
      _
    // Predicated region
    $region6: #{tpu_custom_call.1} parent=1 // pred_check
      _
    $region7: #{tpu_custom_call.1} parent=1 // pred_check_branch
      %24 = sbr.rel (0) target = $region9
    $region8: #{tpu_custom_call.1} parent=1 // pred_region
      %s26 = ssub.s32 512, 512
      %27 = vsyncadd [#allocation7], %s26
      %s28 = sshll.u32 [#allocation6], 4
      %s29 = int_to_ptr.vmem [resolvable:$true] %s28
      %34 = dma.hbm_to_vmem [thread:$0]  %s1, 512, %s29, [#allocation7], 128, 128, 8
    $region9: #{tpu_custom_call.1} parent=1 // pred_fallthru
      _
    // Predicated region
    $region10: #{tpu_custom_call.1} parent=1 // pred_check
      _
    $region11: #{tpu_custom_call.1} parent=1 // pred_check_branch
      %36 = sbr.rel (0) target = $region13
    $region12: #{tpu_custom_call.1} parent=1 // pred_region
      _
    $region13: #{tpu_custom_call.1} parent=1 // pred_fallthru
      _
    // Predicated region
    $region14: #{tpu_custom_call.1} parent=1 // pred_check
      _
    $region15: #{tpu_custom_call.1} parent=1 // pred_check_branch
      %38 = sbr.rel (0) target = $region17
    $region16: #{tpu_custom_call.1} parent=1 // pred_region
      %39 = dma.done [#allocation4], 256
    $region17: #{tpu_custom_call.1} parent=1 // pred_fallthru
      _
    // Predicated region
    $region18: #{tpu_custom_call.1} parent=1 // pred_check
      _
    $region19: #{tpu_custom_call.1} parent=1 // pred_check_branch
      %41 = sbr.rel (0) target = $region21
    $region20: #{tpu_custom_call.1} parent=1 // pred_region
      %42 = dma.done [#allocation7], 512
    $region21: #{tpu_custom_call.1} parent=1 // pred_fallthru
      _
    %p43 = scmp.eq.s32.totalorder 0, 0
    // Predicated region
    $region22: #{tpu_custom_call.1} parent=1 // pred_check
      %p44 = pneg %p43
    $region23: #{tpu_custom_call.1} parent=1 // pred_check_branch
      %46 = sbr.rel (%p44) target = $region25
    $region24: #{tpu_custom_call.1} parent=1 // pred_region
      %vm47 = vcmask 785408
      %48 = vst.msk [vmem:[#allocation2] sm:$0xff] %vm47, 0.0
      %49 = vst.msk [vmem:[#allocation2 + $0x8] sm:$0xff] %vm47, 0.0
    $region25: #{tpu_custom_call.1} parent=1 // pred_fallthru
      _
    %v50 = vld [vmem:[#allocation2] sm:$0xff]
    %v51 = vld [vmem:[#allocation2 + $0x8] sm:$0xff]
    %v52 = vld [vmem:[#allocation3] sm:$0xff]
    %v53 = vld [vmem:[#allocation3 + $0x8] sm:$0xff]
    %v54 = vld [vmem:[#allocation6] sm:$0xff]
    %v55 = vld [vmem:[#allocation6 + $0x8] sm:$0xff]
    %v56 = vld [vmem:[#allocation6 + $0x10] sm:$0xff]
    %v57 = vld [vmem:[#allocation6 + $0x18] sm:$0xff]
    %vm58 = vcmask 261120
    %v60 = vsel %vm58, %v52, 0
    %v63 = vsel %vm58, %v53, 0
    %65 = vmatprep.subr.mxu0 0.0
    %66 = vmatpush1.msra.mxu0 0.0
    %67 = vmatprep.subr.mxu0 0.0
    %68 = vmatpush1.msra.mxu0 0.0
    %69 = vmatprep.subr.mxu0 0.0
    %70 = vmatpush1.msra.mxu0 0.0
    %71 = vmatprep.subr.mxu0 0.0
    %72 = vmatpush1.msra.mxu0 0.0
    %73 = vmatprep.subr.mxu0 0.0
    %74 = vmatpush1.msra.mxu0 0.0
    %75 = vmatprep.subr.mxu0 0.0
    %76 = vmatpush1.msra.mxu0 0.0
    %77 = vmatprep.subr.mxu0 0.0
    %78 = vmatpush1.msra.mxu0 0.0
    %79 = vmatprep.subr.mxu0 0.0
    %80 = vmatpush1.msra.mxu0 0.0
    %81 = vmatprep.subr.mxu0 0.0
    %82 = vmatpush1.msra.mxu0 0.0
    %83 = vmatprep.subr.mxu0 0.0
    %84 = vmatpush1.msra.mxu0 0.0
    %85 = vmatprep.subr.mxu0 0.0
    %86 = vmatpush1.msra.mxu0 0.0
    %87 = vmatprep.subr.mxu0 0.0
    %88 = vmatpush1.msra.mxu0 0.0
    %89 = vmatprep.subr.mxu0 0.0
    %90 = vmatpush1.msra.mxu0 %v57
    %91 = vmatprep.subr.mxu0 0.0
    %92 = vmatpush1.msra.mxu0 %v56
    %93 = vmatprep.subr.mxu0 0.0
    %94 = vmatpush1.msra.mxu0 %v55
    %95 = vmatprep.subr.mxu0 0.0
    %96 = vmatpush1.msra.mxu0 %v54
    %97 = vmatprep.subr.mxu0 0.0
    %98 = vmatpush2.msra.mxu0 0.0
    %99 = vmatprep.subr.mxu0 0.0
    %100 = vmatpush2.msra.mxu0 0.0
    %101 = vmatprep.subr.mxu0 0.0
    %102 = vmatpush2.msra.mxu0 0.0
    %103 = vmatprep.subr.mxu0 0.0
    %104 = vmatpush2.msra.mxu0 0.0
    %105 = vmatprep.subr.mxu0 0.0
    %106 = vmatpush2.msra.mxu0 0.0
    %107 = vmatprep.subr.mxu0 0.0
    %108 = vmatpush2.msra.mxu0 0.0
    %109 = vmatprep.subr.mxu0 0.0
    %110 = vmatpush2.msra.mxu0 0.0
    %111 = vmatprep.subr.mxu0 0.0
    %112 = vmatpush2.msra.mxu0 0.0
    %113 = vmatprep.subr.mxu0 0.0
    %114 = vmatpush2.msra.mxu0 0.0
    %115 = vmatprep.subr.mxu0 0.0
    %116 = vmatpush2.msra.mxu0 0.0
    %117 = vmatprep.subr.mxu0 0.0
    %118 = vmatpush2.msra.mxu0 0.0
    %119 = vmatprep.subr.mxu0 0.0
    %120 = vmatpush2.msra.mxu0 0.0
    %121 = vmatprep.subr.mxu0 0.0
    %122 = vmatpush2.msra.mxu0 0.0
    %123 = vmatprep.subr.mxu0 0.0
    %124 = vmatpush2.msra.mxu0 0.0
    %125 = vmatprep.subr.mxu0 0.0
    %126 = vmatpush2.msra.mxu0 0.0
    %127 = vmatprep.subr.mxu0 0.0
    %128 = vmatpush2.msra.mxu0 0.0
    %129 = vmatprep.mubr.f32.mxu0 0.0
    %130 = vmatmul.mubr.f32.gmra.mxu0 %v60
    %v131 = vpop.f32.mrf.mxu0
    %v132 = vadd.f32 0.0, %v131
    %v133 = vpop.f32.mrf.mxu0
    %134 = vmatprep.mubr.f32.mxu0 0.0
    %135 = vmatmul.mubr.f32.gmra.mxu0 %v63
    %v136 = vpop.f32.mrf.mxu0
    %v137 = vadd.f32 0.0, %v136
    %v138 = vpop.f32.mrf.mxu0
    %139 = vdwg.mxu0
    %v140 = vadd.f32 %v50, %v132
    %v141 = vadd.f32 %v51, %v137
    %vm142 = vcmask 785408
    %143 = vst.msk [vmem:[#allocation2] sm:$0xff] %vm142, %v140
    %144 = vst.msk [vmem:[#allocation2 + $0x8] sm:$0xff] %vm142, %v141
    // Predicated region
    $region26: #{tpu_custom_call.1} parent=1 // pred_check
      %p145 = pneg %p43
    $region27: #{tpu_custom_call.1} parent=1 // pred_check_branch
      %147 = sbr.rel (%p145) target = $region29
    $region28: #{tpu_custom_call.1} parent=1 // pred_region
      %v148 = vld [vmem:[#allocation2] sm:$0xff]
      %v149 = vld [vmem:[#allocation2 + $0x8] sm:$0xff]
      %v150 = vld [vmem:[%s2] sm:$0x1]
      %v152 = vlaneseq
      %v153 = vshrl.u32 %v152, 7
      %v154 = vsub.s32 0, %v153
      %v155 = vrot.slane %v150, %v154
      %v157 = vadd.f32 %v148, %v155
      %v158 = vadd.f32 %v149, %v155
      %159 = vst.msk [vmem:[#allocation8] sm:$0xff] %vm142, %v157
      %160 = vst.msk [vmem:[#allocation8 + $0x8] sm:$0xff] %vm142, %v158
    $region29: #{tpu_custom_call.1} parent=1 // pred_fallthru
      _
    // Predicated region
    $region30: #{tpu_custom_call.1} parent=1 // pred_check
      _
    $region31: #{tpu_custom_call.1} parent=1 // pred_check_branch
      %162 = sbr.rel (0) target = $region33
    $region32: #{tpu_custom_call.1} parent=1 // pred_region
      %s164 = ssub.s32 256, 256
      %165 = vsyncadd [#allocation5], %s164
      %s166 = sshll.u32 [#allocation8], 4
      %s167 = int_to_ptr.vmem [resolvable:$true] %s166
      %172 = dma.vmem_to_hbm [thread:$0]  %s167, 256, %s3, [#allocation5], 128, 128, 8
    $region33: #{tpu_custom_call.1} parent=1 // pred_fallthru
      _
    // Predicated region
    $region34: #{tpu_custom_call.1} parent=1 // pred_check
      _
    $region35: #{tpu_custom_call.1} parent=1 // pred_check_branch
      %174 = sbr.rel (0) target = $region37
    $region36: #{tpu_custom_call.1} parent=1 // pred_region
      %175 = dma.done [#allocation5], 256
    $region37: #{tpu_custom_call.1} parent=1 // pred_fallthru
      _
    %176 = vsyncpa [#allocation4], 1
    %177 = vsyncpa [#allocation7], 1
    %178 = vsyncpa [#allocation5], 1

</llo_original>
